<compile_context>
chip_gen: v6e
topology: v6e:2x2x1
jax: 0.10.0
libtpu: 0.0.40
codegen_flags: <defaults>
</compile_context>

<pallas_src>
import jax
import jax.numpy as jnp
from jax.experimental import pallas as pl
from jax.experimental.pallas import tpu as pltpu

HIDDEN = 256   # fixed by the module definition
LANE = 128     # TPU lane width
SUBLANE = 8    # TPU sublane height (f32)


def _round_up(n, m):
    return ((n + m - 1) // m) * m


def _autoencoder_kernel(x_ref,
                        w1_ref, b1_ref,   # encoder layer 1: (D, 256) bf16, (1, 256) f32
                        w2_ref, b2_ref,   # encoder layer 2: (256, Lp) bf16, (1, Lp) f32
                        w3_ref, b3_ref,   # decoder layer 1: (Lp, 256) bf16, (1, 256) f32
                        w4_ref, b4_ref,   # decoder layer 2: (256, D) bf16, (1, D) f32
                        latent_ref, recon_ref):
    x = x_ref[...].astype(jnp.float32)

    # ----- encoder -----
    h = jnp.dot(x, w1_ref[...].astype(jnp.float32),
                preferred_element_type=jnp.float32) + b1_ref[...]
    h = jnp.maximum(h, 0.0)                      # ReLU
    # Dropout -> identity (eval mode)
    latent = jnp.dot(h, w2_ref[...].astype(jnp.float32),
                     preferred_element_type=jnp.float32) + b2_ref[...]
    latent_ref[...] = latent.astype(latent_ref.dtype)

    # ----- decoder -----
    h2 = jnp.dot(latent, w3_ref[...].astype(jnp.float32),
                 preferred_element_type=jnp.float32) + b3_ref[...]
    h2 = jnp.maximum(h2, 0.0)                    # ReLU
    # Dropout -> identity (eval mode)
    recon = jnp.dot(h2, w4_ref[...].astype(jnp.float32),
                    preferred_element_type=jnp.float32) + b4_ref[...]
    recon_ref[...] = recon.astype(recon_ref.dtype)


def transcriptomic_reducer_forward(x, params):
    """Autoencoder forward pass as a batch-tiled Pallas kernel.

    x: (B, input_dim) float32
    params: dict with w1,b1,w2,b2,w3,b3,w4,b4 (weights pre-transposed (in, out),
            weights bf16, biases f32)
    returns (latent (B, latent_dim), reconstructed (B, input_dim))
    """
    B, D = x.shape
    L = params["w2"].shape[1]
    Lp = _round_up(max(L, 1), LANE)                       # lane-dense latent width

    # Pad the latent-facing params to the lane-dense width (zero columns/rows
    # contribute nothing to the decoder, so semantics are preserved).
    w2, b2, w3 = params["w2"], params["b2"], params["w3"]
    if Lp != L:
        w2 = jnp.pad(w2, ((0, 0), (0, Lp - L)))
        b2 = jnp.pad(b2, ((0, 0), (0, Lp - L)))
        w3 = jnp.pad(w3, ((0, Lp - L), (0, 0)))
    w1, b1, b3, w4, b4 = params["w1"], params["b1"], params["b3"], params["w4"], params["b4"]

    # Batch tile: full MXU-height tiles for large B, never fewer than 8 rows.
    TB = 256 if B >= 256 else _round_up(B, SUBLANE)
    Bp = _round_up(B, TB)
    xp = x if Bp == B else jnp.pad(x, ((0, Bp - B), (0, 0)))
    grid = (Bp // TB,)

    itemsize = xp.dtype.itemsize

    # Streaming tiles: batch index varies with the grid.
    x_spec = pl.BlockSpec((TB, D), lambda i: (i, 0))
    latent_spec = pl.BlockSpec((TB, Lp), lambda i: (i, 0))
    recon_spec = pl.BlockSpec((TB, D), lambda i: (i, 0))

    # Weights/biases: constant index_map -> VMEM-resident across all steps.
    weight_operands = (w1, b1, w2, b2, w3, b3, w4, b4)
    weight_specs = [pl.BlockSpec(a.shape, lambda i: (0, 0)) for a in weight_operands]

    # VMEM budget: resident weights (+ f32-promoted copies), double-buffered
    # x / latent / recon tiles, plus activation scratch and headroom.
    weight_bytes = sum(int(a.size) * a.dtype.itemsize for a in weight_operands)
    stream_bytes = 2 * (TB * D * itemsize + TB * D * itemsize + TB * Lp * itemsize)
    act_bytes = (2 * TB * HIDDEN + TB * Lp + TB * D) * 4
    vmem_limit = min(int(2 * weight_bytes + stream_bytes + act_bytes) + (8 << 20),
                     100 * 1024 * 1024)

    flops = 2 * Bp * 2 * (D * HIDDEN + Lp * HIDDEN)
    bytes_accessed = (Bp * D * itemsize          # x in
                      + Bp * Lp * itemsize       # latent out
                      + Bp * D * itemsize        # recon out
                      + weight_bytes)
    cost = pl.CostEstimate(flops=flops, transcendentals=0,
                           bytes_accessed=bytes_accessed)

    latent_p, recon_p = pl.pallas_call(
        _autoencoder_kernel,
        out_shape=(jax.ShapeDtypeStruct((Bp, Lp), x.dtype),
                   jax.ShapeDtypeStruct((Bp, D), x.dtype)),
        grid_spec=pltpu.PrefetchScalarGridSpec(
            num_scalar_prefetch=0,
            grid=grid,
            in_specs=[x_spec] + weight_specs,
            out_specs=(latent_spec, recon_spec),
        ),
        compiler_params=pltpu.CompilerParams(
            dimension_semantics=("parallel",),
            vmem_limit_bytes=vmem_limit,
        ),
        cost_estimate=cost,
    )(xp, *weight_operands)

    return latent_p[:B, :L], recon_p[:B, :]


def init_params(key, input_dim, latent_dim):
    """Deterministic synthetic parameters (PyTorch Linear default-style uniform init).

    Weights stored pre-transposed (in, out) in bfloat16; biases in float32.
    """
    def linear(key, fan_in, fan_out):
        kw, kb = jax.random.split(key)
        bound = 1.0 / jnp.sqrt(jnp.float32(fan_in))
        w = jax.random.uniform(kw, (fan_in, fan_out), jnp.float32, -bound, bound)
        b = jax.random.uniform(kb, (1, fan_out), jnp.float32, -bound, bound)
        return w.astype(jnp.bfloat16), b

    k1, k2, k3, k4 = jax.random.split(key, 4)
    w1, b1 = linear(k1, input_dim, HIDDEN)
    w2, b2 = linear(k2, HIDDEN, latent_dim)
    w3, b3 = linear(k3, latent_dim, HIDDEN)
    w4, b4 = linear(k4, HIDDEN, input_dim)
    return dict(w1=w1, b1=b1, w2=w2, b2=b2, w3=w3, b3=b3, w4=w4, b4=b4)


def reference_forward(x, p):
    """Pure-JAX reference for correctness checking (same bf16-weight / f32-math path)."""
    w1 = p["w1"].astype(jnp.float32)
    w2 = p["w2"].astype(jnp.float32)
    w3 = p["w3"].astype(jnp.float32)
    w4 = p["w4"].astype(jnp.float32)
    h = jnp.maximum(x @ w1 + p["b1"], 0.0)
    latent = h @ w2 + p["b2"]
    h2 = jnp.maximum(latent @ w3 + p["b3"], 0.0)
    recon = h2 @ w4 + p["b4"]
    return latent, recon


if __name__ == "__main__":
    key = jax.random.PRNGKey(0)
    k_x, k_p = jax.random.split(key)

    batch = 2
    input_dim = 32      # number of gene-expression features
    latent_dim = 8

    x = jax.random.normal(k_x, (batch, input_dim), jnp.float32)
    params = init_params(k_p, input_dim, latent_dim)

    latent, recon = transcriptomic_reducer_forward(x, params)
    jax.block_until_ready((latent, recon))

    # sanity check against pure-JAX reference
    latent_ref, recon_ref = reference_forward(x, params)
    assert latent.shape == (batch, latent_dim)
    assert recon.shape == (batch, input_dim)
    assert jnp.allclose(latent, latent_ref, atol=1e-3, rtol=1e-3)
    assert jnp.allclose(recon, recon_ref, atol=1e-3, rtol=1e-3)

    print("KERNEL_OK")
</pallas_src>

<mosaic_0001>
module attributes {stable_mosaic.version = 11 : i64} {
  func.func @_autoencoder_kernel(%arg0: i32, %arg1: memref<8x32xf32, #tpu.memory_space<vmem>>, %arg2: memref<32x256xbf16, #tpu.memory_space<vmem>>, %arg3: memref<1x256xf32, #tpu.memory_space<vmem>>, %arg4: memref<256x128xbf16, #tpu.memory_space<vmem>>, %arg5: memref<1x128xf32, #tpu.memory_space<vmem>>, %arg6: memref<128x256xbf16, #tpu.memory_space<vmem>>, %arg7: memref<1x256xf32, #tpu.memory_space<vmem>>, %arg8: memref<256x32xbf16, #tpu.memory_space<vmem>>, %arg9: memref<1x32xf32, #tpu.memory_space<vmem>>, %arg10: memref<8x128xf32, #tpu.memory_space<vmem>>, %arg11: memref<8x32xf32, #tpu.memory_space<vmem>>) attributes {dimension_semantics = [#tpu.dimension_semantics<parallel>], iteration_bounds = array<i64: 1>, scalar_prefetch = 0 : i64, scratch_operands = 0 : i64, tpu.core_type = #tpu.core_type<tc>, window_params = [{transform_indices = @transform_0, window_bounds = array<i64: 8, 32>}, {pipeline_mode = #tpu.pipeline_mode<synchronous>, transform_indices = @transform_1, window_bounds = array<i64: 32, 256>}, {pipeline_mode = #tpu.pipeline_mode<synchronous>, transform_indices = @transform_2, window_bounds = array<i64: 1, 256>}, {pipeline_mode = #tpu.pipeline_mode<synchronous>, transform_indices = @transform_3, window_bounds = array<i64: 256, 128>}, {pipeline_mode = #tpu.pipeline_mode<synchronous>, transform_indices = @transform_4, window_bounds = array<i64: 1, 128>}, {pipeline_mode = #tpu.pipeline_mode<synchronous>, transform_indices = @transform_5, window_bounds = array<i64: 128, 256>}, {pipeline_mode = #tpu.pipeline_mode<synchronous>, transform_indices = @transform_6, window_bounds = array<i64: 1, 256>}, {pipeline_mode = #tpu.pipeline_mode<synchronous>, transform_indices = @transform_7, window_bounds = array<i64: 256, 32>}, {pipeline_mode = #tpu.pipeline_mode<synchronous>, transform_indices = @transform_8, window_bounds = array<i64: 1, 32>}, {transform_indices = @transform_9, window_bounds = array<i64: 8, 128>}, {transform_indices = @transform_10, window_bounds = array<i64: 8, 32>}]} {
    %c0 = arith.constant 0 : index
    %c0_0 = arith.constant 0 : index
    %0 = vector.load %arg1[%c0, %c0_0] : memref<8x32xf32, #tpu.memory_space<vmem>>, vector<8x32xf32>
    %c0_1 = arith.constant 0 : index
    %c0_2 = arith.constant 0 : index
    %1 = vector.load %arg2[%c0_1, %c0_2] : memref<32x256xbf16, #tpu.memory_space<vmem>>, vector<32x256xbf16>
    %2 = arith.extf %1 : vector<32x256xbf16> to vector<32x256xf32>
    %cst = arith.constant dense<0.000000e+00> : vector<8x256xf32>
    %3 = tpu.matmul %0, %2, %cst {dimension_numbers = #tpu.dot_dimension_numbers<[1], [0], [0], [1], [0, 0, 1, 1], [], []>} : vector<8x32xf32>, vector<32x256xf32>, vector<8x256xf32> -> vector<8x256xf32>
    %c0_3 = arith.constant 0 : index
    %c0_4 = arith.constant 0 : index
    %4 = vector.load %arg3[%c0_3, %c0_4] : memref<1x256xf32, #tpu.memory_space<vmem>>, vector<1x256xf32>
    %5 = vector.broadcast %4 : vector<1x256xf32> to vector<8x256xf32>
    %6 = arith.addf %3, %5 : vector<8x256xf32>
    %cst_5 = arith.constant 0.000000e+00 : f32
    %7 = vector.broadcast %cst_5 : f32 to vector<8x256xf32>
    %8 = arith.maximumf %6, %7 : vector<8x256xf32>
    %c0_6 = arith.constant 0 : index
    %c0_7 = arith.constant 0 : index
    %9 = vector.load %arg4[%c0_6, %c0_7] : memref<256x128xbf16, #tpu.memory_space<vmem>>, vector<256x128xbf16>
    %10 = arith.extf %9 : vector<256x128xbf16> to vector<256x128xf32>
    %cst_8 = arith.constant dense<0.000000e+00> : vector<8x128xf32>
    %11 = tpu.matmul %8, %10, %cst_8 {dimension_numbers = #tpu.dot_dimension_numbers<[1], [0], [0], [1], [0, 0, 1, 1], [], []>} : vector<8x256xf32>, vector<256x128xf32>, vector<8x128xf32> -> vector<8x128xf32>
    %c0_9 = arith.constant 0 : index
    %c0_10 = arith.constant 0 : index
    %12 = vector.load %arg5[%c0_9, %c0_10] : memref<1x128xf32, #tpu.memory_space<vmem>>, vector<1x128xf32>
    %13 = vector.broadcast %12 : vector<1x128xf32> to vector<8x128xf32>
    %14 = arith.addf %11, %13 : vector<8x128xf32>
    %c0_11 = arith.constant 0 : index
    %c0_12 = arith.constant 0 : index
    %15 = vector.load %arg10[%c0_11, %c0_12] : memref<8x128xf32, #tpu.memory_space<vmem>>, vector<8x128xf32>
    tpu.vector_store %arg10[%c0_11, %c0_12], %14 {strides = array<i32>} : memref<8x128xf32, #tpu.memory_space<vmem>>, vector<8x128xf32>,
    %c0_13 = arith.constant 0 : index
    %c0_14 = arith.constant 0 : index
    %16 = vector.load %arg6[%c0_13, %c0_14] : memref<128x256xbf16, #tpu.memory_space<vmem>>, vector<128x256xbf16>
    %17 = arith.extf %16 : vector<128x256xbf16> to vector<128x256xf32>
    %cst_15 = arith.constant dense<0.000000e+00> : vector<8x256xf32>
    %18 = tpu.matmul %14, %17, %cst_15 {dimension_numbers = #tpu.dot_dimension_numbers<[1], [0], [0], [1], [0, 0, 1, 1], [], []>} : vector<8x128xf32>, vector<128x256xf32>, vector<8x256xf32> -> vector<8x256xf32>
    %c0_16 = arith.constant 0 : index
    %c0_17 = arith.constant 0 : index
    %19 = vector.load %arg7[%c0_16, %c0_17] : memref<1x256xf32, #tpu.memory_space<vmem>>, vector<1x256xf32>
    %20 = vector.broadcast %19 : vector<1x256xf32> to vector<8x256xf32>
    %21 = arith.addf %18, %20 : vector<8x256xf32>
    %cst_18 = arith.constant 0.000000e+00 : f32
    %22 = vector.broadcast %cst_18 : f32 to vector<8x256xf32>
    %23 = arith.maximumf %21, %22 : vector<8x256xf32>
    %c0_19 = arith.constant 0 : index
    %c0_20 = arith.constant 0 : index
    %24 = vector.load %arg8[%c0_19, %c0_20] : memref<256x32xbf16, #tpu.memory_space<vmem>>, vector<256x32xbf16>
    %25 = arith.extf %24 : vector<256x32xbf16> to vector<256x32xf32>
    %cst_21 = arith.constant dense<0.000000e+00> : vector<8x32xf32>
    %26 = tpu.matmul %23, %25, %cst_21 {dimension_numbers = #tpu.dot_dimension_numbers<[1], [0], [0], [1], [0, 0, 1, 1], [], []>} : vector<8x256xf32>, vector<256x32xf32>, vector<8x32xf32> -> vector<8x32xf32>
    %c0_22 = arith.constant 0 : index
    %c0_23 = arith.constant 0 : index
    %27 = vector.load %arg9[%c0_22, %c0_23] : memref<1x32xf32, #tpu.memory_space<vmem>>, vector<1x32xf32>
    %28 = vector.broadcast %27 : vector<1x32xf32> to vector<8x32xf32>
    %29 = arith.addf %26, %28 : vector<8x32xf32>
    %c0_24 = arith.constant 0 : index
    %c0_25 = arith.constant 0 : index
    %30 = vector.load %arg11[%c0_24, %c0_25] : memref<8x32xf32, #tpu.memory_space<vmem>>, vector<8x32xf32>
    tpu.vector_store %arg11[%c0_24, %c0_25], %29 {strides = array<i32>} : memref<8x32xf32, #tpu.memory_space<vmem>>, vector<8x32xf32>,
    return
  }
  func.func @transform_0(%arg0: i32) -> (i32, i32) {
    %c0_i32 = arith.constant 0 : i32
    %c0_i32_0 = arith.constant 0 : i32
    return %arg0, %c0_i32 : i32, i32
  }
  func.func @transform_1(%arg0: i32) -> (i32, i32) {
    %c0_i32 = arith.constant 0 : i32
    %c0_i32_0 = arith.constant 0 : i32
    %c0_i32_1 = arith.constant 0 : i32
    return %c0_i32, %c0_i32_0 : i32, i32
  }
  func.func @transform_2(%arg0: i32) -> (i32, i32) {
    %c0_i32 = arith.constant 0 : i32
    %c0_i32_0 = arith.constant 0 : i32
    %c0_i32_1 = arith.constant 0 : i32
    return %c0_i32, %c0_i32_0 : i32, i32
  }
  func.func @transform_3(%arg0: i32) -> (i32, i32) {
    %c0_i32 = arith.constant 0 : i32
    %c0_i32_0 = arith.constant 0 : i32
    %c0_i32_1 = arith.constant 0 : i32
    return %c0_i32, %c0_i32_0 : i32, i32
  }
  func.func @transform_4(%arg0: i32) -> (i32, i32) {
    %c0_i32 = arith.constant 0 : i32
    %c0_i32_0 = arith.constant 0 : i32
    %c0_i32_1 = arith.constant 0 : i32
    return %c0_i32, %c0_i32_0 : i32, i32
  }
  func.func @transform_5(%arg0: i32) -> (i32, i32) {
    %c0_i32 = arith.constant 0 : i32
    %c0_i32_0 = arith.constant 0 : i32
    %c0_i32_1 = arith.constant 0 : i32
    return %c0_i32, %c0_i32_0 : i32, i32
  }
  func.func @transform_6(%arg0: i32) -> (i32, i32) {
    %c0_i32 = arith.constant 0 : i32
    %c0_i32_0 = arith.constant 0 : i32
    %c0_i32_1 = arith.constant 0 : i32
    return %c0_i32, %c0_i32_0 : i32, i32
  }
  func.func @transform_7(%arg0: i32) -> (i32, i32) {
    %c0_i32 = arith.constant 0 : i32
    %c0_i32_0 = arith.constant 0 : i32
    %c0_i32_1 = arith.constant 0 : i32
    return %c0_i32, %c0_i32_0 : i32, i32
  }
  func.func @transform_8(%arg0: i32) -> (i32, i32) {
    %c0_i32 = arith.constant 0 : i32
    %c0_i32_0 = arith.constant 0 : i32
    %c0_i32_1 = arith.constant 0 : i32
    return %c0_i32, %c0_i32_0 : i32, i32
  }
  func.func @transform_9(%arg0: i32) -> (i32, i32) {
    %c0_i32 = arith.constant 0 : i32
    %c0_i32_0 = arith.constant 0 : i32
    return %arg0, %c0_i32 : i32, i32
  }
  func.func @transform_10(%arg0: i32) -> (i32, i32) {
    %c0_i32 = arith.constant 0 : i32
    %c0_i32_0 = arith.constant 0 : i32
    return %arg0, %c0_i32 : i32, i32
  }
}

</mosaic_0001>

<llo_original>
// kernel: tpu_custom_call.1
$region0: #{tpu_custom_call.1}
  #allocation0 [shape = 'u32[]', space=smem, size = 0x4, offset = 0x4, fixed_abs, tag = 'smem constant byte address 0x4 - core index']
  #allocation1 [shape = 'u32[144,128]{1,0:T(1,128)}', space=vmem, size = 0x12000, scoped, tag = 'internal scratch']
  %s0 = inlined_call_operand.hbm [shape: f32[8,32], index: 0, kind: input, shape index: {}]
  %s1 = inlined_call_operand.vmem [shape: bf16[32,256], index: 1, kind: input, shape index: {}]
  %s2 = inlined_call_operand.vmem [shape: f32[1,256], index: 2, kind: input, shape index: {}]
  %s3 = inlined_call_operand.vmem [shape: bf16[256,128], index: 3, kind: input, shape index: {}]
  %s4 = inlined_call_operand.vmem [shape: f32[1,128], index: 4, kind: input, shape index: {}]
  %s5 = inlined_call_operand.hbm [shape: bf16[128,256], index: 5, kind: input, shape index: {}]
  %s6 = inlined_call_operand.vmem [shape: f32[1,256], index: 6, kind: input, shape index: {}]
  %s7 = inlined_call_operand.vmem [shape: bf16[256,32], index: 7, kind: input, shape index: {}]
  %s8 = inlined_call_operand.vmem [shape: f32[1,32], index: 8, kind: input, shape index: {}]
  %s9 = inlined_call_operand.hbm [shape: f32[8,128], index: 9, kind: output, shape index: {0}]
  %s10 = inlined_call_operand.hbm [shape: f32[8,32], index: 10, kind: output, shape index: {1}]
  %11 = xla_tuple %s9, %s10
  %s12 = sld [smem:[#allocation0]]
  $region62: #{tpu_custom_call.1} parent=0
    _
  %s14 = ssub.s32 1, %s12
  %s15 = scalar_select 0, %s14, %s12
  $region1: #{tpu_custom_call.1} parent=0
    #allocation2 [shape = 'u8[4096]{0}', space=vmem, size = 0x1000, scoped, tag = 'input window, operand 0, single buffered']
    #allocation3 [shape = 's32[1]{0}', space=sflag, size = 0x4, scoped, tag = 'scoped memory for tpu_custom_call.1']
    #allocation4 [shape = 's32[1]{0}', space=sflag, size = 0x4, scoped, tag = 'scoped memory for tpu_custom_call.1']
    #allocation5 [shape = 'u8[65536]{0}', space=vmem, size = 0x10000, scoped, tag = 'input window, operand 5, single buffered']
    #allocation6 [shape = 's32[1]{0}', space=sflag, size = 0x4, scoped, tag = 'scoped memory for tpu_custom_call.1']
    #allocation7 [shape = 'u8[4096]{0}', space=vmem, size = 0x1000, scoped, tag = 'output window, operand 0, single buffered']
    #allocation8 [shape = 'u8[4096]{0}', space=vmem, size = 0x1000, scoped, tag = 'output window, operand 1, single buffered']
    #allocation9 [shape = 's32[1]{0}', space=sflag, size = 0x4, scoped, tag = 'scoped memory for tpu_custom_call.1']
    %16 = vsyncpa [#allocation3], 0
    %17 = vsyncpa [#allocation6], 0
    %18 = vsyncpa [#allocation4], 0
    %19 = vsyncpa [#allocation9], 0
    // Predicated region
    $region2: #{tpu_custom_call.1} parent=1 // pred_check
      _
    $region3: #{tpu_custom_call.1} parent=1 // pred_check_branch
      %21 = sbr.rel (0) target = $region5
    $region4: #{tpu_custom_call.1} parent=1 // pred_region
      %s23 = ssub.s32 128, 128
      %24 = vsyncadd [#allocation3], %s23
      %s26 = sshll.u32 [#allocation2], 4
      %s27 = int_to_ptr.vmem [resolvable:$true] %s26
      %29 = dma.hbm_to_vmem [thread:$0]  %s0, 128, %s27, [#allocation3]
    $region5: #{tpu_custom_call.1} parent=1 // pred_fallthru
      _
    // Predicated region
    $region6: #{tpu_custom_call.1} parent=1 // pred_check
      _
    $region7: #{tpu_custom_call.1} parent=1 // pred_check_branch
      %31 = sbr.rel (0) target = $region9
    $region8: #{tpu_custom_call.1} parent=1 // pred_region
      _
    $region9: #{tpu_custom_call.1} parent=1 // pred_fallthru
      _
    // Predicated region
    $region10: #{tpu_custom_call.1} parent=1 // pred_check
      _
    $region11: #{tpu_custom_call.1} parent=1 // pred_check_branch
      %33 = sbr.rel (0) target = $region13
    $region12: #{tpu_custom_call.1} parent=1 // pred_region
      _
    $region13: #{tpu_custom_call.1} parent=1 // pred_fallthru
      _
    // Predicated region
    $region14: #{tpu_custom_call.1} parent=1 // pred_check
      _
    $region15: #{tpu_custom_call.1} parent=1 // pred_check_branch
      %35 = sbr.rel (0) target = $region17
    $region16: #{tpu_custom_call.1} parent=1 // pred_region
      _
    $region17: #{tpu_custom_call.1} parent=1 // pred_fallthru
      _
    // Predicated region
    $region18: #{tpu_custom_call.1} parent=1 // pred_check
      _
    $region19: #{tpu_custom_call.1} parent=1 // pred_check_branch
      %37 = sbr.rel (0) target = $region21
    $region20: #{tpu_custom_call.1} parent=1 // pred_region
      _
    $region21: #{tpu_custom_call.1} parent=1 // pred_fallthru
      _
    // Predicated region
    $region22: #{tpu_custom_call.1} parent=1 // pred_check
      _
    $region23: #{tpu_custom_call.1} parent=1 // pred_check_branch
      %39 = sbr.rel (0) target = $region25
    $region24: #{tpu_custom_call.1} parent=1 // pred_region
      %s41 = ssub.s32 2048, 2048
      %42 = vsyncadd [#allocation6], %s41
      %s43 = sshll.u32 [#allocation5], 4
      %s44 = int_to_ptr.vmem [resolvable:$true] %s43
      %49 = dma.hbm_to_vmem [thread:$0]  %s5, 2048, %s44, [#allocation6], 128, 128, 8
    $region25: #{tpu_custom_call.1} parent=1 // pred_fallthru
      _
    // Predicated region
    $region26: #{tpu_custom_call.1} parent=1 // pred_check
      _
    $region27: #{tpu_custom_call.1} parent=1 // pred_check_branch
      %51 = sbr.rel (0) target = $region29
    $region28: #{tpu_custom_call.1} parent=1 // pred_region
      _
    $region29: #{tpu_custom_call.1} parent=1 // pred_fallthru
      _
    // Predicated region
    $region30: #{tpu_custom_call.1} parent=1 // pred_check
      _
    $region31: #{tpu_custom_call.1} parent=1 // pred_check_branch
      %53 = sbr.rel (0) target = $region33
    $region32: #{tpu_custom_call.1} parent=1 // pred_region
      _
    $region33: #{tpu_custom_call.1} parent=1 // pred_fallthru
      _
    // Predicated region
    $region34: #{tpu_custom_call.1} parent=1 // pred_check
      _
    $region35: #{tpu_custom_call.1} parent=1 // pred_check_branch
      %55 = sbr.rel (0) target = $region37
    $region36: #{tpu_custom_call.1} parent=1 // pred_region
      _
    $region37: #{tpu_custom_call.1} parent=1 // pred_fallthru
      _
    // Predicated region
    $region38: #{tpu_custom_call.1} parent=1 // pred_check
      _
    $region39: #{tpu_custom_call.1} parent=1 // pred_check_branch
      %57 = sbr.rel (0) target = $region41
    $region40: #{tpu_custom_call.1} parent=1 // pred_region
      %58 = dma.done [#allocation3], 128
    $region41: #{tpu_custom_call.1} parent=1 // pred_fallthru
      _
    // Predicated region
    $region42: #{tpu_custom_call.1} parent=1 // pred_check
      _
    $region43: #{tpu_custom_call.1} parent=1 // pred_check_branch
      %60 = sbr.rel (0) target = $region45
    $region44: #{tpu_custom_call.1} parent=1 // pred_region
      %61 = dma.done [#allocation6], 2048
    $region45: #{tpu_custom_call.1} parent=1 // pred_fallthru
      _
    %v62 = vld [vmem:[#allocation2] sm:$0xff]
    %v63 = vld [vmem:[%s1] sm:$0xff]
    %v64 = vld [vmem:[%s1 + $0x8] sm:$0xff]
    %v65 = vld [vmem:[%s1 + $0x10] sm:$0xff]
    %v66 = vld [vmem:[%s1 + $0x18] sm:$0xff]
    %v67 = vunpack.c.l.bf16 %v63
    %v68 = vunpack.c.h.bf16 %v63
    %v69 = vunpack.c.l.bf16 %v64
    %v70 = vunpack.c.h.bf16 %v64
    %v71 = vunpack.c.l.bf16 %v65
    %v72 = vunpack.c.h.bf16 %v65
    %v73 = vunpack.c.l.bf16 %v66
    %v74 = vunpack.c.h.bf16 %v66
    %v75 = vld [vmem:[%s2] sm:$0x3]
    %v77 = vlaneseq
    %v78 = vshrl.u32 %v77, 7
    %v79 = vsub.s32 0, %v78
    %v80 = vrot.slane %v75, %v79
    %v81 = vlaneseq
    %v82 = vshrl.u32 %v81, 7
    %v83 = vsub.s32 1, %v82
    %v84 = vrot.slane %v75, %v83
    %vm87 = vcmask 261120
    %v89 = vsel %vm87, %v62, 0
    %91 = vmatprep.subr.mxu0 0.0
    %92 = vmatpush1.msra.mxu0 0.0
    %93 = vmatprep.subr.mxu0 0.0
    %94 = vmatpush1.msra.mxu0 0.0
    %95 = vmatprep.subr.mxu0 0.0
    %96 = vmatpush1.msra.mxu0 0.0
    %97 = vmatprep.subr.mxu0 0.0
    %98 = vmatpush1.msra.mxu0 0.0
    %99 = vmatprep.subr.mxu0 0.0
    %100 = vmatpush1.msra.mxu0 0.0
    %101 = vmatprep.subr.mxu0 0.0
    %102 = vmatpush1.msra.mxu0 0.0
    %103 = vmatprep.subr.mxu0 0.0
    %104 = vmatpush1.msra.mxu0 0.0
    %105 = vmatprep.subr.mxu0 0.0
    %106 = vmatpush1.msra.mxu0 0.0
    %107 = vmatprep.subr.mxu0 0.0
    %108 = vmatpush1.msra.mxu0 0.0
    %109 = vmatprep.subr.mxu0 0.0
    %110 = vmatpush1.msra.mxu0 0.0
    %111 = vmatprep.subr.mxu0 0.0
    %112 = vmatpush1.msra.mxu0 0.0
    %113 = vmatprep.subr.mxu0 0.0
    %114 = vmatpush1.msra.mxu0 0.0
    %115 = vmatprep.subr.mxu0 %v74
    %116 = vmatpush1.msra.mxu0 %v73
    %117 = vmatprep.subr.mxu0 %v72
    %118 = vmatpush1.msra.mxu0 %v71
    %119 = vmatprep.subr.mxu0 %v70
    %120 = vmatpush1.msra.mxu0 %v69
    %121 = vmatprep.subr.mxu0 %v68
    %122 = vmatpush1.msra.mxu0 %v67
    %123 = vmatprep.subr.mxu0 0.0
    %124 = vmatpush2.msra.mxu0 0.0
    %125 = vmatprep.subr.mxu0 0.0
    %126 = vmatpush2.msra.mxu0 0.0
    %127 = vmatprep.subr.mxu0 0.0
    %128 = vmatpush2.msra.mxu0 0.0
    %129 = vmatprep.subr.mxu0 0.0
    %130 = vmatpush2.msra.mxu0 0.0
    %131 = vmatprep.subr.mxu0 0.0
    %132 = vmatpush2.msra.mxu0 0.0
    %133 = vmatprep.subr.mxu0 0.0
    %134 = vmatpush2.msra.mxu0 0.0
    %135 = vmatprep.subr.mxu0 0.0
    %136 = vmatpush2.msra.mxu0 0.0
    %137 = vmatprep.subr.mxu0 0.0
    %138 = vmatpush2.msra.mxu0 0.0
    %139 = vmatprep.subr.mxu0 0.0
    %140 = vmatpush2.msra.mxu0 0.0
    %141 = vmatprep.subr.mxu0 0.0
    %142 = vmatpush2.msra.mxu0 0.0
    %143 = vmatprep.subr.mxu0 0.0
    %144 = vmatpush2.msra.mxu0 0.0
    %145 = vmatprep.subr.mxu0 0.0
    %146 = vmatpush2.msra.mxu0 0.0
    %147 = vmatprep.subr.mxu0 0.0
    %148 = vmatpush2.msra.mxu0 0.0
    %149 = vmatprep.subr.mxu0 0.0
    %150 = vmatpush2.msra.mxu0 0.0
    %151 = vmatprep.subr.mxu0 0.0
    %152 = vmatpush2.msra.mxu0 0.0
    %153 = vmatprep.subr.mxu0 0.0
    %154 = vmatpush2.msra.mxu0 0.0
    %155 = vmatprep.mubr.f32.mxu0 0.0
    %156 = vmatmul.mubr.f32.gmra.mxu0 %v89
    %v157 = vpop.f32.mrf.mxu0
    %v158 = vadd.f32 %v80, %v157
    %v159 = vpop.f32.mrf.mxu0
    %v160 = vadd.f32 %v84, %v159
    %161 = vdwg.mxu0
    %v162 = vmax.f32 %v158, 0.0
    %v163 = vmax.f32 %v160, 0.0
    %v164 = vld [vmem:[%s3] sm:$0xf]
    %v165 = vld [vmem:[%s3 + $0x4] sm:$0xf]
    %v166 = vld [vmem:[%s3 + $0x8] sm:$0xf]
    %v167 = vld [vmem:[%s3 + $0xc] sm:$0xf]
    %v168 = vld [vmem:[%s3 + $0x10] sm:$0xf]
    %v169 = vld [vmem:[%s3 + $0x14] sm:$0xf]
    %v170 = vld [vmem:[%s3 + $0x18] sm:$0xf]
    %v171 = vld [vmem:[%s3 + $0x1c] sm:$0xf]
    %v172 = vld [vmem:[%s3 + $0x20] sm:$0xf]
    %v173 = vld [vmem:[%s3 + $0x24] sm:$0xf]
    %v174 = vld [vmem:[%s3 + $0x28] sm:$0xf]
    %v175 = vld [vmem:[%s3 + $0x2c] sm:$0xf]
    %v176 = vld [vmem:[%s3 + $0x30] sm:$0xf]
    %v177 = vld [vmem:[%s3 + $0x34] sm:$0xf]
    %v178 = vld [vmem:[%s3 + $0x38] sm:$0xf]
    %v179 = vld [vmem:[%s3 + $0x3c] sm:$0xf]
    %v180 = vld [vmem:[%s3 + $0x40] sm:$0xf]
    %v181 = vld [vmem:[%s3 + $0x44] sm:$0xf]
    %v182 = vld [vmem:[%s3 + $0x48] sm:$0xf]
    %v183 = vld [vmem:[%s3 + $0x4c] sm:$0xf]
    %v184 = vld [vmem:[%s3 + $0x50] sm:$0xf]
    %v185 = vld [vmem:[%s3 + $0x54] sm:$0xf]
    %v186 = vld [vmem:[%s3 + $0x58] sm:$0xf]
    %v187 = vld [vmem:[%s3 + $0x5c] sm:$0xf]
    %v188 = vld [vmem:[%s3 + $0x60] sm:$0xf]
    %v189 = vld [vmem:[%s3 + $0x64] sm:$0xf]
    %v190 = vld [vmem:[%s3 + $0x68] sm:$0xf]
    %v191 = vld [vmem:[%s3 + $0x6c] sm:$0xf]
    %v192 = vld [vmem:[%s3 + $0x70] sm:$0xf]
    %v193 = vld [vmem:[%s3 + $0x74] sm:$0xf]
    %v194 = vld [vmem:[%s3 + $0x78] sm:$0xf]
    %v195 = vld [vmem:[%s3 + $0x7c] sm:$0xf]
    %v196 = vunpack.c.l.bf16 %v164
    %v197 = vunpack.c.l.bf16 %v165
    %v198 = vunpack.c.l.bf16 %v166
    %v199 = vunpack.c.l.bf16 %v167
    %v200 = vunpack.c.l.bf16 %v168
    %v201 = vunpack.c.l.bf16 %v169
    %v202 = vunpack.c.l.bf16 %v170
    %v203 = vunpack.c.l.bf16 %v171
    %v204 = vunpack.c.l.bf16 %v172
    %v205 = vunpack.c.l.bf16 %v173
    %v206 = vunpack.c.l.bf16 %v174
    %v207 = vunpack.c.l.bf16 %v175
    %v208 = vunpack.c.l.bf16 %v176
    %v209 = vunpack.c.l.bf16 %v177
    %v210 = vunpack.c.l.bf16 %v178
    %v211 = vunpack.c.l.bf16 %v179
    %v212 = vunpack.c.l.bf16 %v180
    %v213 = vunpack.c.l.bf16 %v181
    %v214 = vunpack.c.l.bf16 %v182
    %v215 = vunpack.c.l.bf16 %v183
    %v216 = vunpack.c.l.bf16 %v184
    %v217 = vunpack.c.l.bf16 %v185
    %v218 = vunpack.c.l.bf16 %v186
    %v219 = vunpack.c.l.bf16 %v187
    %v220 = vunpack.c.l.bf16 %v188
    %v221 = vunpack.c.l.bf16 %v189
    %v222 = vunpack.c.l.bf16 %v190
    %v223 = vunpack.c.l.bf16 %v191
    %v224 = vunpack.c.l.bf16 %v192
    %v225 = vunpack.c.l.bf16 %v193
    %v226 = vunpack.c.l.bf16 %v194
    %v227 = vunpack.c.l.bf16 %v195
    %v228 = vld [vmem:[%s4] sm:$0x1]
    %v230 = vlaneseq
    %v231 = vshrl.u32 %v230, 7
    %v232 = vsub.s32 0, %v231
    %v233 = vrot.slane %v228, %v232
    %235 = vmatprep.subr.mxu0 0.0
    %236 = vmatpush1.msra.mxu0 %v211
    %237 = vmatprep.subr.mxu0 0.0
    %238 = vmatpush1.msra.mxu0 %v210
    %239 = vmatprep.subr.mxu0 0.0
    %240 = vmatpush1.msra.mxu0 %v209
    %241 = vmatprep.subr.mxu0 0.0
    %242 = vmatpush1.msra.mxu0 %v208
    %243 = vmatprep.subr.mxu0 0.0
    %244 = vmatpush1.msra.mxu0 %v207
    %245 = vmatprep.subr.mxu0 0.0
    %246 = vmatpush1.msra.mxu0 %v206
    %247 = vmatprep.subr.mxu0 0.0
    %248 = vmatpush1.msra.mxu0 %v205
    %249 = vmatprep.subr.mxu0 0.0
    %250 = vmatpush1.msra.mxu0 %v204
    %251 = vmatprep.subr.mxu0 0.0
    %252 = vmatpush1.msra.mxu0 %v203
    %253 = vmatprep.subr.mxu0 0.0
    %254 = vmatpush1.msra.mxu0 %v202
    %255 = vmatprep.subr.mxu0 0.0
    %256 = vmatpush1.msra.mxu0 %v201
    %257 = vmatprep.subr.mxu0 0.0
    %258 = vmatpush1.msra.mxu0 %v200
    %259 = vmatprep.subr.mxu0 0.0
    %260 = vmatpush1.msra.mxu0 %v199
    %261 = vmatprep.subr.mxu0 0.0
    %262 = vmatpush1.msra.mxu0 %v198
    %263 = vmatprep.subr.mxu0 0.0
    %264 = vmatpush1.msra.mxu0 %v197
    %265 = vmatprep.subr.mxu0 0.0
    %266 = vmatpush1.msra.mxu0 %v196
    %267 = vmatprep.subr.mxu0 0.0
    %268 = vmatpush2.msra.mxu0 %v227
    %269 = vmatprep.subr.mxu0 0.0
    %270 = vmatpush2.msra.mxu0 %v226
    %271 = vmatprep.subr.mxu0 0.0
    %272 = vmatpush2.msra.mxu0 %v225
    %273 = vmatprep.subr.mxu0 0.0
    %274 = vmatpush2.msra.mxu0 %v224
    %275 = vmatprep.subr.mxu0 0.0
    %276 = vmatpush2.msra.mxu0 %v223
    %277 = vmatprep.subr.mxu0 0.0
    %278 = vmatpush2.msra.mxu0 %v222
    %279 = vmatprep.subr.mxu0 0.0
    %280 = vmatpush2.msra.mxu0 %v221
    %281 = vmatprep.subr.mxu0 0.0
    %282 = vmatpush2.msra.mxu0 %v220
    %283 = vmatprep.subr.mxu0 0.0
    %284 = vmatpush2.msra.mxu0 %v219
    %285 = vmatprep.subr.mxu0 0.0
    %286 = vmatpush2.msra.mxu0 %v218
    %287 = vmatprep.subr.mxu0 0.0
    %288 = vmatpush2.msra.mxu0 %v217
    %289 = vmatprep.subr.mxu0 0.0
    %290 = vmatpush2.msra.mxu0 %v216
    %291 = vmatprep.subr.mxu0 0.0
    %292 = vmatpush2.msra.mxu0 %v215
    %293 = vmatprep.subr.mxu0 0.0
    %294 = vmatpush2.msra.mxu0 %v214
    %295 = vmatprep.subr.mxu0 0.0
    %296 = vmatpush2.msra.mxu0 %v213
    %297 = vmatprep.subr.mxu0 0.0
    %298 = vmatpush2.msra.mxu0 %v212
    %299 = vmatprep.mubr.f32.mxu0 %v163
    %300 = vmatmul.mubr.f32.gmra.mxu0 %v162
    %v301 = vpop.f32.mrf.mxu0
    %v302 = vadd.f32 %v233, %v301
    %v303 = vpop.f32.mrf.mxu0
    %304 = vdwg.mxu0
    %305 = vst [vmem:[#allocation7] sm:$0xff] %v302
    %v306 = vld [vmem:[#allocation5] sm:$0xff]
    %v307 = vld [vmem:[#allocation5 + $0x8] sm:$0xff]
    %v308 = vld [vmem:[#allocation5 + $0x10] sm:$0xff]
    %v309 = vld [vmem:[#allocation5 + $0x18] sm:$0xff]
    %v310 = vld [vmem:[#allocation5 + $0x20] sm:$0xff]
    %v311 = vld [vmem:[#allocation5 + $0x28] sm:$0xff]
    %v312 = vld [vmem:[#allocation5 + $0x30] sm:$0xff]
    %v313 = vld [vmem:[#allocation5 + $0x38] sm:$0xff]
    %v314 = vld [vmem:[#allocation5 + $0x40] sm:$0xff]
    %v315 = vld [vmem:[#allocation5 + $0x48] sm:$0xff]
    %v316 = vld [vmem:[#allocation5 + $0x50] sm:$0xff]
    %v317 = vld [vmem:[#allocation5 + $0x58] sm:$0xff]
    %v318 = vld [vmem:[#allocation5 + $0x60] sm:$0xff]
    %v319 = vld [vmem:[#allocation5 + $0x68] sm:$0xff]
    %v320 = vld [vmem:[#allocation5 + $0x70] sm:$0xff]
    %v321 = vld [vmem:[#allocation5 + $0x78] sm:$0xff]
    %v322 = vunpack.c.l.bf16 %v306
    %v323 = vunpack.c.h.bf16 %v306
    %v324 = vunpack.c.l.bf16 %v307
    %v325 = vunpack.c.h.bf16 %v307
    %v326 = vunpack.c.l.bf16 %v308
    %v327 = vunpack.c.h.bf16 %v308
    %v328 = vunpack.c.l.bf16 %v309
    %v329 = vunpack.c.h.bf16 %v309
    %v330 = vunpack.c.l.bf16 %v310
    %v331 = vunpack.c.h.bf16 %v310
    %v332 = vunpack.c.l.bf16 %v311
    %v333 = vunpack.c.h.bf16 %v311
    %v334 = vunpack.c.l.bf16 %v312
    %v335 = vunpack.c.h.bf16 %v312
    %v336 = vunpack.c.l.bf16 %v313
    %v337 = vunpack.c.h.bf16 %v313
    %v338 = vunpack.c.l.bf16 %v314
    %v339 = vunpack.c.h.bf16 %v314
    %v340 = vunpack.c.l.bf16 %v315
    %v341 = vunpack.c.h.bf16 %v315
    %v342 = vunpack.c.l.bf16 %v316
    %v343 = vunpack.c.h.bf16 %v316
    %v344 = vunpack.c.l.bf16 %v317
    %v345 = vunpack.c.h.bf16 %v317
    %v346 = vunpack.c.l.bf16 %v318
    %v347 = vunpack.c.h.bf16 %v318
    %v348 = vunpack.c.l.bf16 %v319
    %v349 = vunpack.c.h.bf16 %v319
    %v350 = vunpack.c.l.bf16 %v320
    %v351 = vunpack.c.h.bf16 %v320
    %v352 = vunpack.c.l.bf16 %v321
    %v353 = vunpack.c.h.bf16 %v321
    %v354 = vld [vmem:[%s6] sm:$0x3]
    %v356 = vlaneseq
    %v357 = vshrl.u32 %v356, 7
    %v358 = vsub.s32 0, %v357
    %v359 = vrot.slane %v354, %v358
    %v360 = vlaneseq
    %v361 = vshrl.u32 %v360, 7
    %v362 = vsub.s32 1, %v361
    %v363 = vrot.slane %v354, %v362
    %366 = vmatprep.subr.mxu0 %v353
    %367 = vmatpush1.msra.mxu0 %v352
    %368 = vmatprep.subr.mxu0 %v351
    %369 = vmatpush1.msra.mxu0 %v350
    %370 = vmatprep.subr.mxu0 %v349
    %371 = vmatpush1.msra.mxu0 %v348
    %372 = vmatprep.subr.mxu0 %v347
    %373 = vmatpush1.msra.mxu0 %v346
    %374 = vmatprep.subr.mxu0 %v345
    %375 = vmatpush1.msra.mxu0 %v344
    %376 = vmatprep.subr.mxu0 %v343
    %377 = vmatpush1.msra.mxu0 %v342
    %378 = vmatprep.subr.mxu0 %v341
    %379 = vmatpush1.msra.mxu0 %v340
    %380 = vmatprep.subr.mxu0 %v339
    %381 = vmatpush1.msra.mxu0 %v338
    %382 = vmatprep.subr.mxu0 %v337
    %383 = vmatpush1.msra.mxu0 %v336
    %384 = vmatprep.subr.mxu0 %v335
    %385 = vmatpush1.msra.mxu0 %v334
    %386 = vmatprep.subr.mxu0 %v333
    %387 = vmatpush1.msra.mxu0 %v332
    %388 = vmatprep.subr.mxu0 %v331
    %389 = vmatpush1.msra.mxu0 %v330
    %390 = vmatprep.subr.mxu0 %v329
    %391 = vmatpush1.msra.mxu0 %v328
    %392 = vmatprep.subr.mxu0 %v327
    %393 = vmatpush1.msra.mxu0 %v326
    %394 = vmatprep.subr.mxu0 %v325
    %395 = vmatpush1.msra.mxu0 %v324
    %396 = vmatprep.subr.mxu0 %v323
    %397 = vmatpush1.msra.mxu0 %v322
    %398 = vmatprep.subr.mxu0 0.0
    %399 = vmatpush2.msra.mxu0 0.0
    %400 = vmatprep.subr.mxu0 0.0
    %401 = vmatpush2.msra.mxu0 0.0
    %402 = vmatprep.subr.mxu0 0.0
    %403 = vmatpush2.msra.mxu0 0.0
    %404 = vmatprep.subr.mxu0 0.0
    %405 = vmatpush2.msra.mxu0 0.0
    %406 = vmatprep.subr.mxu0 0.0
    %407 = vmatpush2.msra.mxu0 0.0
    %408 = vmatprep.subr.mxu0 0.0
    %409 = vmatpush2.msra.mxu0 0.0
    %410 = vmatprep.subr.mxu0 0.0
    %411 = vmatpush2.msra.mxu0 0.0
    %412 = vmatprep.subr.mxu0 0.0
    %413 = vmatpush2.msra.mxu0 0.0
    %414 = vmatprep.subr.mxu0 0.0
    %415 = vmatpush2.msra.mxu0 0.0
    %416 = vmatprep.subr.mxu0 0.0
    %417 = vmatpush2.msra.mxu0 0.0
    %418 = vmatprep.subr.mxu0 0.0
    %419 = vmatpush2.msra.mxu0 0.0
    %420 = vmatprep.subr.mxu0 0.0
    %421 = vmatpush2.msra.mxu0 0.0
    %422 = vmatprep.subr.mxu0 0.0
    %423 = vmatpush2.msra.mxu0 0.0
    %424 = vmatprep.subr.mxu0 0.0
    %425 = vmatpush2.msra.mxu0 0.0
    %426 = vmatprep.subr.mxu0 0.0
    %427 = vmatpush2.msra.mxu0 0.0
    %428 = vmatprep.subr.mxu0 0.0
    %429 = vmatpush2.msra.mxu0 0.0
    %430 = vmatprep.mubr.f32.mxu0 0.0
    %431 = vmatmul.mubr.f32.gmra.mxu0 %v302
    %v432 = vpop.f32.mrf.mxu0
    %v433 = vadd.f32 %v359, %v432
    %v434 = vpop.f32.mrf.mxu0
    %v435 = vadd.f32 %v363, %v434
    %436 = vdwg.mxu0
    %v437 = vmax.f32 %v433, 0.0
    %v438 = vmax.f32 %v435, 0.0
    %v439 = vld [vmem:[%s7] sm:$0xf]
    %v440 = vld [vmem:[%s7 + $0x4] sm:$0xf]
    %v441 = vld [vmem:[%s7 + $0x8] sm:$0xf]
    %v442 = vld [vmem:[%s7 + $0xc] sm:$0xf]
    %v443 = vld [vmem:[%s7 + $0x10] sm:$0xf]
    %v444 = vld [vmem:[%s7 + $0x14] sm:$0xf]
    %v445 = vld [vmem:[%s7 + $0x18] sm:$0xf]
    %v446 = vld [vmem:[%s7 + $0x1c] sm:$0xf]
    %v447 = vld [vmem:[%s7 + $0x20] sm:$0xf]
    %v448 = vld [vmem:[%s7 + $0x24] sm:$0xf]
    %v449 = vld [vmem:[%s7 + $0x28] sm:$0xf]
    %v450 = vld [vmem:[%s7 + $0x2c] sm:$0xf]
    %v451 = vld [vmem:[%s7 + $0x30] sm:$0xf]
    %v452 = vld [vmem:[%s7 + $0x34] sm:$0xf]
    %v453 = vld [vmem:[%s7 + $0x38] sm:$0xf]
    %v454 = vld [vmem:[%s7 + $0x3c] sm:$0xf]
    %v455 = vld [vmem:[%s7 + $0x40] sm:$0xf]
    %v456 = vld [vmem:[%s7 + $0x44] sm:$0xf]
    %v457 = vld [vmem:[%s7 + $0x48] sm:$0xf]
    %v458 = vld [vmem:[%s7 + $0x4c] sm:$0xf]
    %v459 = vld [vmem:[%s7 + $0x50] sm:$0xf]
    %v460 = vld [vmem:[%s7 + $0x54] sm:$0xf]
    %v461 = vld [vmem:[%s7 + $0x58] sm:$0xf]
    %v462 = vld [vmem:[%s7 + $0x5c] sm:$0xf]
    %v463 = vld [vmem:[%s7 + $0x60] sm:$0xf]
    %v464 = vld [vmem:[%s7 + $0x64] sm:$0xf]
    %v465 = vld [vmem:[%s7 + $0x68] sm:$0xf]
    %v466 = vld [vmem:[%s7 + $0x6c] sm:$0xf]
    %v467 = vld [vmem:[%s7 + $0x70] sm:$0xf]
    %v468 = vld [vmem:[%s7 + $0x74] sm:$0xf]
    %v469 = vld [vmem:[%s7 + $0x78] sm:$0xf]
    %v470 = vld [vmem:[%s7 + $0x7c] sm:$0xf]
    %v471 = vunpack.c.l.bf16 %v439
    %v472 = vunpack.c.l.bf16 %v440
    %v473 = vunpack.c.l.bf16 %v441
    %v474 = vunpack.c.l.bf16 %v442
    %v475 = vunpack.c.l.bf16 %v443
    %v476 = vunpack.c.l.bf16 %v444
    %v477 = vunpack.c.l.bf16 %v445
    %v478 = vunpack.c.l.bf16 %v446
    %v479 = vunpack.c.l.bf16 %v447
    %v480 = vunpack.c.l.bf16 %v448
    %v481 = vunpack.c.l.bf16 %v449
    %v482 = vunpack.c.l.bf16 %v450
    %v483 = vunpack.c.l.bf16 %v451
    %v484 = vunpack.c.l.bf16 %v452
    %v485 = vunpack.c.l.bf16 %v453
    %v486 = vunpack.c.l.bf16 %v454
    %v487 = vunpack.c.l.bf16 %v455
    %v488 = vunpack.c.l.bf16 %v456
    %v489 = vunpack.c.l.bf16 %v457
    %v490 = vunpack.c.l.bf16 %v458
    %v491 = vunpack.c.l.bf16 %v459
    %v492 = vunpack.c.l.bf16 %v460
    %v493 = vunpack.c.l.bf16 %v461
    %v494 = vunpack.c.l.bf16 %v462
    %v495 = vunpack.c.l.bf16 %v463
    %v496 = vunpack.c.l.bf16 %v464
    %v497 = vunpack.c.l.bf16 %v465
    %v498 = vunpack.c.l.bf16 %v466
    %v499 = vunpack.c.l.bf16 %v467
    %v500 = vunpack.c.l.bf16 %v468
    %v501 = vunpack.c.l.bf16 %v469
    %v502 = vunpack.c.l.bf16 %v470
    %v503 = vld [vmem:[%s8] sm:$0x1]
    %v505 = vlaneseq
    %v506 = vshrl.u32 %v505, 7
    %v507 = vsub.s32 0, %v506
    %v508 = vrot.slane %v503, %v507
    %510 = vmatprep.subr.mxu0 0.0
    %511 = vmatpush1.msra.mxu0 %v486
    %512 = vmatprep.subr.mxu0 0.0
    %513 = vmatpush1.msra.mxu0 %v485
    %514 = vmatprep.subr.mxu0 0.0
    %515 = vmatpush1.msra.mxu0 %v484
    %516 = vmatprep.subr.mxu0 0.0
    %517 = vmatpush1.msra.mxu0 %v483
    %518 = vmatprep.subr.mxu0 0.0
    %519 = vmatpush1.msra.mxu0 %v482
    %520 = vmatprep.subr.mxu0 0.0
    %521 = vmatpush1.msra.mxu0 %v481
    %522 = vmatprep.subr.mxu0 0.0
    %523 = vmatpush1.msra.mxu0 %v480
    %524 = vmatprep.subr.mxu0 0.0
    %525 = vmatpush1.msra.mxu0 %v479
    %526 = vmatprep.subr.mxu0 0.0
    %527 = vmatpush1.msra.mxu0 %v478
    %528 = vmatprep.subr.mxu0 0.0
    %529 = vmatpush1.msra.mxu0 %v477
    %530 = vmatprep.subr.mxu0 0.0
    %531 = vmatpush1.msra.mxu0 %v476
    %532 = vmatprep.subr.mxu0 0.0
    %533 = vmatpush1.msra.mxu0 %v475
    %534 = vmatprep.subr.mxu0 0.0
    %535 = vmatpush1.msra.mxu0 %v474
    %536 = vmatprep.subr.mxu0 0.0
    %537 = vmatpush1.msra.mxu0 %v473
    %538 = vmatprep.subr.mxu0 0.0
    %539 = vmatpush1.msra.mxu0 %v472
    %540 = vmatprep.subr.mxu0 0.0
    %541 = vmatpush1.msra.mxu0 %v471
    %542 = vmatprep.subr.mxu0 0.0
    %543 = vmatpush2.msra.mxu0 %v502
    %544 = vmatprep.subr.mxu0 0.0
    %545 = vmatpush2.msra.mxu0 %v501
    %546 = vmatprep.subr.mxu0 0.0
    %547 = vmatpush2.msra.mxu0 %v500
    %548 = vmatprep.subr.mxu0 0.0
    %549 = vmatpush2.msra.mxu0 %v499
    %550 = vmatprep.subr.mxu0 0.0
    %551 = vmatpush2.msra.mxu0 %v498
    %552 = vmatprep.subr.mxu0 0.0
    %553 = vmatpush2.msra.mxu0 %v497
    %554 = vmatprep.subr.mxu0 0.0
    %555 = vmatpush2.msra.mxu0 %v496
    %556 = vmatprep.subr.mxu0 0.0
    %557 = vmatpush2.msra.mxu0 %v495
    %558 = vmatprep.subr.mxu0 0.0
    %559 = vmatpush2.msra.mxu0 %v494
    %560 = vmatprep.subr.mxu0 0.0
    %561 = vmatpush2.msra.mxu0 %v493
    %562 = vmatprep.subr.mxu0 0.0
    %563 = vmatpush2.msra.mxu0 %v492
    %564 = vmatprep.subr.mxu0 0.0
    %565 = vmatpush2.msra.mxu0 %v491
    %566 = vmatprep.subr.mxu0 0.0
    %567 = vmatpush2.msra.mxu0 %v490
    %568 = vmatprep.subr.mxu0 0.0
    %569 = vmatpush2.msra.mxu0 %v489
    %570 = vmatprep.subr.mxu0 0.0
    %571 = vmatpush2.msra.mxu0 %v488
    %572 = vmatprep.subr.mxu0 0.0
    %573 = vmatpush2.msra.mxu0 %v487
    %574 = vmatprep.mubr.f32.mxu0 %v438
    %575 = vmatmul.mubr.f32.gmra.mxu0 %v437
    %v576 = vpop.f32.mrf.mxu0
    %v577 = vadd.f32 %v508, %v576
    %v578 = vpop.f32.mrf.mxu0
    %579 = vdwg.mxu0
    %580 = vst.msk [vmem:[#allocation8] sm:$0xff] %vm87, %v577
    // Predicated region
    $region46: #{tpu_custom_call.1} parent=1 // pred_check
      _
    $region47: #{tpu_custom_call.1} parent=1 // pred_check_branch
      %582 = sbr.rel (0) target = $region49
    $region48: #{tpu_custom_call.1} parent=1 // pred_region
      %s584 = ssub.s32 128, 128
      %585 = vsyncadd [#allocation4], %s584
      %s587 = sshll.u32 [#allocation7], 4
      %s588 = int_to_ptr.vmem [resolvable:$true] %s587
      %590 = dma.vmem_to_hbm [thread:$0]  %s588, 128, %s9, [#allocation4]
    $region49: #{tpu_custom_call.1} parent=1 // pred_fallthru
      _
    // Predicated region
    $region50: #{tpu_custom_call.1} parent=1 // pred_check
      _
    $region51: #{tpu_custom_call.1} parent=1 // pred_check_branch
      %592 = sbr.rel (0) target = $region53
    $region52: #{tpu_custom_call.1} parent=1 // pred_region
      %s594 = ssub.s32 128, 128
      %595 = vsyncadd [#allocation9], %s594
      %s597 = sshll.u32 [#allocation8], 4
      %s598 = int_to_ptr.vmem [resolvable:$true] %s597
      %600 = dma.vmem_to_hbm [thread:$0]  %s598, 128, %s10, [#allocation9]
    $region53: #{tpu_custom_call.1} parent=1 // pred_fallthru
      _
    // Predicated region
    $region54: #{tpu_custom_call.1} parent=1 // pred_check
      _
    $region55: #{tpu_custom_call.1} parent=1 // pred_check_branch
      %602 = sbr.rel (0) target = $region57
    $region56: #{tpu_custom_call.1} parent=1 // pred_region
      %603 = dma.done [#allocation4], 128
    $region57: #{tpu_custom_call.1} parent=1 // pred_fallthru
      _
    // Predicated region
    $region58: #{tpu_custom_call.1} parent=1 // pred_check
      _
    $region59: #{tpu_custom_call.1} parent=1 // pred_check_branch
      %605 = sbr.rel (0) target = $region61
    $region60: #{tpu_custom_call.1} parent=1 // pred_region
      %606 = dma.done [#allocation9], 128
    $region61: #{tpu_custom_call.1} parent=1 // pred_fallthru
      _
    %607 = vsyncpa [#allocation3], 1
    %608 = vsyncpa [#allocation6], 1
    %609 = vsyncpa [#allocation4], 1
    %610 = vsyncpa [#allocation9], 1

</llo_original>
